<compile_context>
chip_gen: v6e
topology: v6e:2x2x1
jax: 0.10.0
libtpu: 0.0.40
codegen_flags: <defaults>
</compile_context>

<pallas_src>
import functools
import math

import jax
import jax.numpy as jnp
from jax.experimental import pallas as pl
from jax.experimental.pallas import tpu as pltpu

EPS = 1e-5  # matches the PyTorch module


def _round_up(x, m):
    return ((x + m - 1) // m) * m


# ---------------------------------------------------------------------------
# Kernel A: LayerNorm over the last (lane) axis of a (TR, C) row tile.
# ---------------------------------------------------------------------------
def _layernorm_kernel(x_ref, w_ref, b_ref, o_ref, *, eps):
    x = x_ref[...].astype(jnp.float32)                       # (TR, C)
    inv_c = jnp.float32(1.0 / x.shape[-1])

    # Two-pass statistics: x is already resident in VMEM/vregs, so the second
    # sweep is pure (hidden) VALU work under the HBM roofline.
    mu = jnp.sum(x, axis=-1, keepdims=True) * inv_c          # (TR, 1)
    d = x - mu
    var = jnp.sum(d * d, axis=-1, keepdims=True) * inv_c     # biased variance
    inv_std = jax.lax.rsqrt(var + eps)                       # EUP rsqrt

    w = w_ref[...].astype(jnp.float32)                       # (1, C)
    b = b_ref[...].astype(jnp.float32)                       # (1, C)
    o_ref[...] = (d * inv_std * w + b).astype(o_ref.dtype)


# ---------------------------------------------------------------------------
# Kernel B (small-C path): k = 128 // C rows folded into the 128-lane axis.
# seg is a (128,128) segment-averaging matrix (seg[l,l'] = 1/C if l,l' belong
# to the same C-wide segment), so x @ seg gives the per-row per-segment mean
# already broadcast back to every lane.  Loads/stores stay lane-dense.
# ---------------------------------------------------------------------------
def _layernorm_folded_kernel(x_ref, w_ref, b_ref, seg_ref, o_ref, *, eps):
    x = x_ref[...].astype(jnp.float32)                       # (TR, 128)
    seg = seg_ref[...]                                       # (128, 128) f32
    mu = jnp.dot(x, seg, preferred_element_type=jnp.float32)
    d = x - mu
    var = jnp.dot(d * d, seg, preferred_element_type=jnp.float32)
    inv_std = jax.lax.rsqrt(var + eps)
    o_ref[...] = (d * inv_std * w_ref[...] + b_ref[...]).astype(o_ref.dtype)


# ---------------------------------------------------------------------------
# Row-tile sizing: ~2 MiB blocks, VMEM-budgeted, >= 2 blocks for megacore.
# ---------------------------------------------------------------------------
def _choose_rows_per_block(n_rows, row_bytes, sub):
    # ~2 MiB activation blocks (past the ~1 MiB knee for HBM-bound streaming),
    # capped so double-buffered in + out + f32 temporaries stay well under the
    # 32 MiB scoped-VMEM limit requested below (fits all of v5e/v6e/v7x).
    tr_target = max(sub, (2 * 1024 * 1024) // row_bytes)
    tr_vmem = max(sub, (20 * 1024 * 1024) // (6 * row_bytes))
    tr_cap = max(sub, (min(tr_target, tr_vmem) // sub) * sub)
    if n_rows <= sub:
        return n_rows                       # single full-extent block
    # Guarantee at least 2 grid blocks so ("parallel",) can split across the
    # two TensorCores on v7x (measured no-op on single-TC v5e/v6e).
    tr_half = _round_up(pl.cdiv(n_rows, 2), sub)
    return min(tr_cap, tr_half)


def _compiler_params():
    return pltpu.CompilerParams(
        dimension_semantics=("parallel",),
        vmem_limit_bytes=32 * 1024 * 1024,
    )


# ---------------------------------------------------------------------------
# Wrapper: flatten leading dims -> (R, C), tile rows on a 1-D parallel grid.
# ---------------------------------------------------------------------------
def withbias_layernorm(x, weight, bias, *, eps=EPS):
    orig_shape = x.shape
    C = orig_shape[-1]
    R = math.prod(orig_shape[:-1])
    dtype = x.dtype
    itemsize = jnp.dtype(dtype).itemsize
    sub = {4: 8, 2: 16, 1: 32}.get(itemsize, 8)   # sublane packing granularity

    use_fold = (C < 128) and (128 % C == 0)

    if not use_fold:
        # ------------------------- main (lane-dense C) path ----------------
        x2 = x.reshape(R, C)
        w2 = weight.reshape(1, C)
        b2 = bias.reshape(1, C)

        tr = _choose_rows_per_block(R, C * itemsize, sub)
        num_blocks = pl.cdiv(R, tr)   # ragged last block: OOB reads don't-care,
                                      # OOB writes dropped (rows independent).
        cost = pl.CostEstimate(
            flops=9 * R * C,
            transcendentals=R,
            bytes_accessed=2 * R * C * itemsize + 2 * C * itemsize,
        )
        out = pl.pallas_call(
            functools.partial(_layernorm_kernel, eps=eps),
            out_shape=jax.ShapeDtypeStruct((R, C), dtype),
            grid=(num_blocks,),
            in_specs=[
                pl.BlockSpec((tr, C), lambda i: (i, 0)),   # activation tile
                pl.BlockSpec((1, C), lambda i: (0, 0)),    # weight (resident)
                pl.BlockSpec((1, C), lambda i: (0, 0)),    # bias   (resident)
            ],
            out_specs=pl.BlockSpec((tr, C), lambda i: (i, 0)),
            compiler_params=_compiler_params(),
            cost_estimate=cost,
        )(x2, w2, b2)
        return out.reshape(orig_shape)

    # ----------------------------- small-C folded path ---------------------
    k = 128 // C
    Rp = _round_up(R, k)
    x2 = x.reshape(R, C)
    if Rp != R:
        # Only up to k-1 extra rows, needed to make the lane-fold reshape legal.
        x2 = jnp.pad(x2, ((0, Rp - R), (0, 0)))
    Rf = Rp // k
    xf = x2.reshape(Rf, 128)

    wf = jnp.tile(weight.reshape(1, C).astype(jnp.float32), (1, k))
    bf = jnp.tile(bias.reshape(1, C).astype(jnp.float32), (1, k))
    lane = jnp.arange(128, dtype=jnp.int32)
    seg = (lane[:, None] // C == lane[None, :] // C).astype(jnp.float32) / C

    tr = _choose_rows_per_block(Rf, 128 * itemsize, sub)
    num_blocks = pl.cdiv(Rf, tr)
    cost = pl.CostEstimate(
        flops=(9 + 4 * 128) * Rf * 128,
        transcendentals=Rf * 128,
        bytes_accessed=2 * Rf * 128 * itemsize + 3 * 128 * 128 * 4,
    )
    out = pl.pallas_call(
        functools.partial(_layernorm_folded_kernel, eps=eps),
        out_shape=jax.ShapeDtypeStruct((Rf, 128), dtype),
        grid=(num_blocks,),
        in_specs=[
            pl.BlockSpec((tr, 128), lambda i: (i, 0)),     # folded activations
            pl.BlockSpec((1, 128), lambda i: (0, 0)),      # tiled weight
            pl.BlockSpec((1, 128), lambda i: (0, 0)),      # tiled bias
            pl.BlockSpec((128, 128), lambda i: (0, 0)),    # segment-mean matrix
        ],
        out_specs=pl.BlockSpec((tr, 128), lambda i: (i, 0)),
        compiler_params=_compiler_params(),
        cost_estimate=cost,
    )(xf, wf, bf, seg)

    out = out.reshape(Rp, C)
    if Rp != R:
        out = out[:R]
    return out.reshape(orig_shape)


# ---------------------------------------------------------------------------
# Pure-JAX reference (mirrors the PyTorch forward exactly).
# ---------------------------------------------------------------------------
def _ref_layernorm(x, weight, bias, eps=EPS):
    mu = x.mean(-1, keepdims=True)
    var = ((x - mu) ** 2).mean(-1, keepdims=True)   # unbiased=False
    return (x - mu) / jnp.sqrt(var + eps) * weight + bias


# ---------------------------------------------------------------------------
if __name__ == "__main__":
    key = jax.random.PRNGKey(0)
    kx, kw, kb, ks, kr = jax.random.split(key, 5)

    ln = jax.jit(withbias_layernorm)

    # FDHIFusion applies this LayerNorm to flattened image tokens (B, H*W, C).
    B, H, W, C = 2, 16, 16, 128
    x = jax.random.normal(kx, (B, H * W, C), jnp.float32)
    weight = jax.random.normal(kw, (C,), jnp.float32)
    bias = jax.random.normal(kb, (C,), jnp.float32)

    out = jax.block_until_ready(ln(x, weight, bias))
    ref = _ref_layernorm(x, weight, bias)
    assert out.shape == x.shape, out.shape
    max_err = float(jnp.max(jnp.abs(out - ref)))
    assert max_err < 1e-4, f"max abs error too large: {max_err}"

    # Ragged row count on the main path (no wrapper pad/slice; last grid block
    # is partial — OOB writes are dropped).
    x_r = jax.random.normal(kr, (2, 100, 128), jnp.float32)
    out_r = jax.block_until_ready(ln(x_r, weight, bias))
    ref_r = _ref_layernorm(x_r, weight, bias)
    max_err_r = float(jnp.max(jnp.abs(out_r - ref_r)))
    assert max_err_r < 1e-4, f"max abs error too large (ragged case): {max_err_r}"

    # Small C (=32) -> lane-dense folded path, odd row count.
    x_s = jax.random.normal(ks, (3, 10, 32), jnp.float32)
    w_s = jnp.ones((32,), jnp.float32)     # module's default init
    b_s = jnp.zeros((32,), jnp.float32)
    out_s = jax.block_until_ready(jax.jit(withbias_layernorm)(x_s, w_s, b_s))
    ref_s = _ref_layernorm(x_s, w_s, b_s)
    max_err_s = float(jnp.max(jnp.abs(out_s - ref_s)))
    assert max_err_s < 1e-4, f"max abs error too large (small-C case): {max_err_s}"

    print("KERNEL_OK")
</pallas_src>

<mosaic_0001>
module attributes {stable_mosaic.version = 11 : i64} {
  func.func @_layernorm_kernel(%arg0: i32, %arg1: memref<256x128xf32, #tpu.memory_space<vmem>>, %arg2: memref<1x128xf32, #tpu.memory_space<vmem>>, %arg3: memref<1x128xf32, #tpu.memory_space<vmem>>, %arg4: memref<256x128xf32, #tpu.memory_space<vmem>>) attributes {dimension_semantics = [#tpu.dimension_semantics<parallel>], iteration_bounds = array<i64: 2>, scalar_prefetch = 0 : i64, scratch_operands = 0 : i64, tpu.core_type = #tpu.core_type<tc>, window_params = [{transform_indices = @transform_0, window_bounds = array<i64: 256, 128>}, {pipeline_mode = #tpu.pipeline_mode<synchronous>, transform_indices = @transform_1, window_bounds = array<i64: 1, 128>}, {pipeline_mode = #tpu.pipeline_mode<synchronous>, transform_indices = @transform_2, window_bounds = array<i64: 1, 128>}, {transform_indices = @transform_3, window_bounds = array<i64: 256, 128>}]} {
    %c0 = arith.constant 0 : index
    %c0_0 = arith.constant 0 : index
    %0 = vector.load %arg1[%c0, %c0_0] : memref<256x128xf32, #tpu.memory_space<vmem>>, vector<256x128xf32>
    %cst = arith.constant dense<0.000000e+00> : vector<256xf32>
    %1 = vector.multi_reduction <add>, %0, %cst [1] : vector<256x128xf32> to vector<256xf32>
    %2 = vector.shape_cast %1 : vector<256xf32> to vector<256x1xf32>
    %cst_1 = arith.constant 7.812500e-03 : f32
    %3 = vector.broadcast %cst_1 : f32 to vector<256x1xf32>
    %4 = arith.mulf %2, %3 : vector<256x1xf32>
    %5 = vector.broadcast %4 : vector<256x1xf32> to vector<256x128xf32>
    %6 = arith.subf %0, %5 : vector<256x128xf32>
    %7 = arith.mulf %6, %6 : vector<256x128xf32>
    %cst_2 = arith.constant dense<0.000000e+00> : vector<256xf32>
    %8 = vector.multi_reduction <add>, %7, %cst_2 [1] : vector<256x128xf32> to vector<256xf32>
    %9 = vector.shape_cast %8 : vector<256xf32> to vector<256x1xf32>
    %cst_3 = arith.constant 7.812500e-03 : f32
    %10 = vector.broadcast %cst_3 : f32 to vector<256x1xf32>
    %11 = arith.mulf %9, %10 : vector<256x1xf32>
    %cst_4 = arith.constant 9.99999974E-6 : f32
    %12 = vector.broadcast %cst_4 : f32 to vector<256x1xf32>
    %13 = arith.addf %11, %12 : vector<256x1xf32>
    %14 = math.rsqrt %13 : vector<256x1xf32>
    %c0_5 = arith.constant 0 : index
    %c0_6 = arith.constant 0 : index
    %15 = vector.load %arg2[%c0_5, %c0_6] : memref<1x128xf32, #tpu.memory_space<vmem>>, vector<1x128xf32>
    %c0_7 = arith.constant 0 : index
    %c0_8 = arith.constant 0 : index
    %16 = vector.load %arg3[%c0_7, %c0_8] : memref<1x128xf32, #tpu.memory_space<vmem>>, vector<1x128xf32>
    %17 = vector.broadcast %14 : vector<256x1xf32> to vector<256x128xf32>
    %18 = arith.mulf %6, %17 : vector<256x128xf32>
    %19 = vector.broadcast %15 : vector<1x128xf32> to vector<256x128xf32>
    %20 = arith.mulf %18, %19 : vector<256x128xf32>
    %21 = vector.broadcast %16 : vector<1x128xf32> to vector<256x128xf32>
    %22 = arith.addf %20, %21 : vector<256x128xf32>
    %c0_9 = arith.constant 0 : index
    %c0_10 = arith.constant 0 : index
    %23 = vector.load %arg4[%c0_9, %c0_10] : memref<256x128xf32, #tpu.memory_space<vmem>>, vector<256x128xf32>
    tpu.vector_store %arg4[%c0_9, %c0_10], %22 {strides = array<i32>} : memref<256x128xf32, #tpu.memory_space<vmem>>, vector<256x128xf32>,
    return
  }
  func.func @transform_0(%arg0: i32) -> (i32, i32) {
    %c0_i32 = arith.constant 0 : i32
    %c0_i32_0 = arith.constant 0 : i32
    return %arg0, %c0_i32 : i32, i32
  }
  func.func @transform_1(%arg0: i32) -> (i32, i32) {
    %c0_i32 = arith.constant 0 : i32
    %c0_i32_0 = arith.constant 0 : i32
    %c0_i32_1 = arith.constant 0 : i32
    return %c0_i32, %c0_i32_0 : i32, i32
  }
  func.func @transform_2(%arg0: i32) -> (i32, i32) {
    %c0_i32 = arith.constant 0 : i32
    %c0_i32_0 = arith.constant 0 : i32
    %c0_i32_1 = arith.constant 0 : i32
    return %c0_i32, %c0_i32_0 : i32, i32
  }
  func.func @transform_3(%arg0: i32) -> (i32, i32) {
    %c0_i32 = arith.constant 0 : i32
    %c0_i32_0 = arith.constant 0 : i32
    return %arg0, %c0_i32 : i32, i32
  }
}

</mosaic_0001>

<llo_original>
// kernel: withbias_layernorm.1
$region0: #{withbias_layernorm.1}
  #allocation0 [shape = 'u32[]', space=smem, size = 0x4, offset = 0x4, fixed_abs, tag = 'smem constant byte address 0x4 - core index']
  #allocation1 [shape = 'u32[144,128]{1,0:T(1,128)}', space=vmem, size = 0x12000, scoped, tag = 'internal scratch']
  %s0 = inlined_call_operand.hbm [shape: f32[512,128], index: 0, kind: input, shape index: {}]
  %s1 = inlined_call_operand.vmem [shape: f32[1,128], index: 1, kind: input, shape index: {}]
  %s2 = inlined_call_operand.vmem [shape: f32[1,128], index: 2, kind: input, shape index: {}]
  %s3 = inlined_call_operand.hbm [shape: f32[512,128], index: 3, kind: output, shape index: {}]
  %s4 = sld [smem:[#allocation0]]
  $region49: #{withbias_layernorm.1} parent=0
    _
  %s6 = ssub.s32 1, %s4
  %s7 = scalar_select 0, %s6, %s4
  $region1: #{withbias_layernorm.1} parent=0
    #allocation2 [shape = 'u8[262144]{0}', space=vmem, size = 0x40000, scoped, tag = 'input window, operand 0']
    #allocation3 [shape = 's32[2]{0}', space=sflag, size = 0x8, scoped, tag = 'scoped memory for withbias_layernorm.1']
    #allocation4 [shape = 's32[2]{0}', space=sflag, size = 0x8, scoped, tag = 'scoped memory for withbias_layernorm.1']
    #allocation5 [shape = 'u8[262144]{0}', space=vmem, size = 0x40000, scoped, tag = 'output window, operand 0']
    %8 = vsyncpa [#allocation3], 0
    %s9 = scalar_lea.sflag [#allocation3], 1
    %10 = vsyncpa %s9, 0
    %11 = vsyncpa [#allocation4], 0
    %s12 = scalar_lea.sflag [#allocation4], 1
    %13 = vsyncpa %s12, 0
    loop: start=0, step=1, limit=4
    $region2: #{withbias_layernorm.1} parent=1 // loop_pre_header
      _
    $region3: #{withbias_layernorm.1} parent=1 // loop_header
      %s15 = sphi 0, %s19
      %p16 = scmp.ge.s32.totalorder %s15, 4
      %s25 = sphi 0, %s27
      %s28 = sphi 0, %s25
      %s29 = sphi 0, %s28
      %s45 = sphi 0, %s29
      %s49 = sphi 0, %s49
      %s51 = sphi 0, %s49
      %s52 = sphi 0, %s51
      %s66 = sphi 0, %s52
      %s70 = sphi 0, %s70
      %s72 = sphi 0, %s70
      %s73 = sphi 0, %s72
      %s87 = sphi 0, %s73
      %s93 = sphi 0, %s95
      %s96 = sphi 0, %s93
      %s97 = sphi 0, %s96
      %s113 = sphi 0, %s97
    $region4: #{withbias_layernorm.1} parent=1 // loop_header_branch
      %18 = sbr.rel (%p16) target = $region8
    $region5: #{withbias_layernorm.1} parent=1 // loop_body
      %s20 = ssub.s32 %s15, 1
      %s21 = ssub.s32 %s15, 2
      %s22 = sadd.s32 %s15, 1
      %s23 = ssub.s32 %s15, %s22
      %p24 = scmp.eq.s32.totalorder %s23, 0
      %s26 = sadd.s32 %s25, 1
      %s27 = scalar_select %p24, %s25, %s26
      %p30 = pneg %p24
      %p31 = scmp.eq.s32.totalorder %s15, 1
      %p32 = por %p30, %p31
      %p33 = scmp.ne.s32.totalorder %s25, %s28
      %p34 = scmp.eq.s32.totalorder %s15, 0
      %p35 = por %p33, %p34
      %p36 = scmp.ne.s32.totalorder %s25, %s28
      %p37 = scmp.eq.s32.totalorder %s20, 1
      %p38 = por %p36, %p37
      %p39 = scmp.ne.s32.totalorder %s28, %s29
      %p40 = scmp.eq.s32.totalorder %s20, 0
      %p41 = por %p39, %p40
      %p42 = scmp.ne.s32.totalorder %s28, %s29
      %p43 = scmp.eq.s32.totalorder %s21, 1
      %p44 = por %p42, %p43
      %p46 = scmp.ne.s32.totalorder %s29, %s45
      %p47 = scmp.eq.s32.totalorder %s21, 0
      %p48 = por %p46, %p47
      %s50 = sadd.s32 %s49, 1
      %p53 = scmp.eq.s32.totalorder %s15, 1
      %p54 = scmp.ne.s32.totalorder %s49, %s51
      %p55 = scmp.eq.s32.totalorder %s15, 0
      %p56 = por %p54, %p55
      %p57 = scmp.ne.s32.totalorder %s49, %s51
      %p58 = scmp.eq.s32.totalorder %s20, 1
      %p59 = por %p57, %p58
      %p60 = scmp.ne.s32.totalorder %s51, %s52
      %p61 = scmp.eq.s32.totalorder %s20, 0
      %p62 = por %p60, %p61
      %p63 = scmp.ne.s32.totalorder %s51, %s52
      %p64 = scmp.eq.s32.totalorder %s21, 1
      %p65 = por %p63, %p64
      %p67 = scmp.ne.s32.totalorder %s52, %s66
      %p68 = scmp.eq.s32.totalorder %s21, 0
      %p69 = por %p67, %p68
      %s71 = sadd.s32 %s70, 1
      %p74 = scmp.eq.s32.totalorder %s15, 1
      %p75 = scmp.ne.s32.totalorder %s70, %s72
      %p76 = scmp.eq.s32.totalorder %s15, 0
      %p77 = por %p75, %p76
      %p78 = scmp.ne.s32.totalorder %s70, %s72
      %p79 = scmp.eq.s32.totalorder %s20, 1
      %p80 = por %p78, %p79
      %p81 = scmp.ne.s32.totalorder %s72, %s73
      %p82 = scmp.eq.s32.totalorder %s20, 0
      %p83 = por %p81, %p82
      %p84 = scmp.ne.s32.totalorder %s72, %s73
      %p85 = scmp.eq.s32.totalorder %s21, 1
      %p86 = por %p84, %p85
      %p88 = scmp.ne.s32.totalorder %s73, %s87
      %p89 = scmp.eq.s32.totalorder %s21, 0
      %p90 = por %p88, %p89
      %s91 = ssub.s32 %s15, %s22
      %p92 = scmp.eq.s32.totalorder %s91, 0
      %s94 = sadd.s32 %s93, 1
      %s95 = scalar_select %p92, %s93, %s94
      %p98 = pneg %p92
      %p99 = scmp.eq.s32.totalorder %s15, 1
      %p100 = por %p98, %p99
      %p101 = scmp.ne.s32.totalorder %s93, %s96
      %p102 = scmp.eq.s32.totalorder %s15, 0
      %p103 = por %p101, %p102
      %p104 = scmp.ne.s32.totalorder %s93, %s96
      %p105 = scmp.eq.s32.totalorder %s20, 1
      %p106 = por %p104, %p105
      %p107 = scmp.ne.s32.totalorder %s96, %s97
      %p108 = scmp.eq.s32.totalorder %s20, 0
      %p109 = por %p107, %p108
      %p110 = scmp.ne.s32.totalorder %s96, %s97
      %p111 = scmp.eq.s32.totalorder %s21, 1
      %p112 = por %p110, %p111
      %p114 = scmp.ne.s32.totalorder %s97, %s113
      %p115 = scmp.eq.s32.totalorder %s21, 0
      %p116 = por %p114, %p115
      %p117 = scmp.le.s32.totalorder 1, %s15
      %p118 = scmp.lt.s32.totalorder %s15, 3
      %p119 = pnand %p117, %p118
      %p120 = pneg %p119
      // Predicated region
      $region9: #{withbias_layernorm.1} parent=5 // pred_check
        _
      $region10: #{withbias_layernorm.1} parent=5 // pred_check_branch
        %122 = sbr.rel (%p119) target = $region12
      $region11: #{withbias_layernorm.1} parent=5 // pred_region
        %s123 = ssub.s32 %s15, 1
        // Predicated region
        $region13: #{withbias_layernorm.1} parent=11 // pred_check
          %p124 = pneg %p62
        $region14: #{withbias_layernorm.1} parent=11 // pred_check_branch
          %126 = sbr.rel (%p124) target = $region16
        $region15: #{withbias_layernorm.1} parent=11 // pred_region
          _
        $region16: #{withbias_layernorm.1} parent=11 // pred_fallthru
          _
        // Predicated region
        $region17: #{withbias_layernorm.1} parent=11 // pred_check
          %p127 = pneg %p83
        $region18: #{withbias_layernorm.1} parent=11 // pred_check_branch
          %129 = sbr.rel (%p127) target = $region20
        $region19: #{withbias_layernorm.1} parent=11 // pred_region
          _
        $region20: #{withbias_layernorm.1} parent=11 // pred_fallthru
          _
      $region12: #{withbias_layernorm.1} parent=5 // pred_fallthru
        _
      %p130 = scmp.lt.s32.totalorder %s15, 2
      // Predicated region
      $region21: #{withbias_layernorm.1} parent=5 // pred_check
        %p131 = pneg %p130
      $region22: #{withbias_layernorm.1} parent=5 // pred_check_branch
        %133 = sbr.rel (%p131) target = $region24
      $region23: #{withbias_layernorm.1} parent=5 // pred_region
        // Predicated region
        $region25: #{withbias_layernorm.1} parent=23 // pred_check
          %p134 = pneg %p35
        $region26: #{withbias_layernorm.1} parent=23 // pred_check_branch
          %136 = sbr.rel (%p134) target = $region28
        $region27: #{withbias_layernorm.1} parent=23 // pred_region
          %s137 = sand.u32 %s25, 1
          %s138 = scalar_lea.sflag [#allocation3], %s137
          %s139 = sand.u32 %s25, 1
          %s140 = smul.addr %s139, 256
          %s141 = scalar_lea.vmem [#allocation2], %s140
          %s142 = smul.u32 32, %s15
          %s144 = ssub.s32 4096, 4096
          %145 = vsyncadd %s138, %s144
          %s146 = smul.addr %s142, 128
          %s147 = scalar_lea.hbm %s0, %s146
          %s148 = sshll.u32 %s141, 4
          %s149 = int_to_ptr.vmem [resolvable:$true] %s148
          %154 = dma.hbm_to_vmem [thread:$0]  %s147, 4096, %s149, %s138, 128, 128, 8
        $region28: #{withbias_layernorm.1} parent=23 // pred_fallthru
          _
      $region24: #{withbias_layernorm.1} parent=5 // pred_fallthru
        _
      %p155 = scmp.le.s32.totalorder 1, %s15
      %p156 = scmp.lt.s32.totalorder %s15, 3
      %p157 = pnand %p155, %p156
      %p158 = pneg %p157
      // Predicated region
      $region29: #{withbias_layernorm.1} parent=5 // pred_check
        _
      $region30: #{withbias_layernorm.1} parent=5 // pred_check_branch
        %160 = sbr.rel (%p157) target = $region32
      $region31: #{withbias_layernorm.1} parent=5 // pred_region
        %s161 = ssub.s32 %s15, 1
        %s162 = sand.u32 %s28, 1
        %s163 = scalar_lea.sflag [#allocation3], %s162
        %s164 = sand.u32 %s28, 1
        %s165 = smul.addr %s164, 256
        %s166 = scalar_lea.vmem [#allocation2], %s165
        // Predicated region
        $region33: #{withbias_layernorm.1} parent=31 // pred_check
          %p167 = pneg %p41
        $region34: #{withbias_layernorm.1} parent=31 // pred_check_branch
          %169 = sbr.rel (%p167) target = $region36
        $region35: #{withbias_layernorm.1} parent=31 // pred_region
          %170 = dma.done %s163, 4096
        $region36: #{withbias_layernorm.1} parent=31 // pred_fallthru
          _
        %s171 = sand.u32 %s28, 1
        %s172 = scalar_lea.sflag [#allocation3], %s171
        %s173 = sand.u32 %s28, 1
        %s174 = smul.addr %s173, 256
        %s175 = scalar_lea.vmem [#allocation2], %s174
        %p176 = pneg %p41
        %p177 = pneg %p38
        %p178 = pneg %p62
        %p179 = pneg %p59
        %p180 = pneg %p83
        %p181 = pneg %p80
        %p182 = pneg %p109
        %p183 = pneg %p106
        %s184 = sand.u32 %s96, 1
        %s185 = scalar_lea.sflag [#allocation4], %s184
        %s186 = sand.u32 %s96, 1
        %s187 = smul.addr %s186, 256
        %s188 = scalar_lea.vmem [#allocation5], %s187
        %s189 = smul.u32 32, %s20
        %s190 = smul.u32 32, %s20
        %v191 = vld [vmem:[%s166] sm:$0xff]
        %v192 = vld [vmem:[%s166 + $0x8] sm:$0xff]
        %v193 = vld [vmem:[%s166 + $0x10] sm:$0xff]
        %v194 = vld [vmem:[%s166 + $0x18] sm:$0xff]
        %v195 = vld [vmem:[%s166 + $0x20] sm:$0xff]
        %v196 = vld [vmem:[%s166 + $0x28] sm:$0xff]
        %v197 = vld [vmem:[%s166 + $0x30] sm:$0xff]
        %v198 = vld [vmem:[%s166 + $0x38] sm:$0xff]
        %v199 = vld [vmem:[%s166 + $0x40] sm:$0xff]
        %v200 = vld [vmem:[%s166 + $0x48] sm:$0xff]
        %v201 = vld [vmem:[%s166 + $0x50] sm:$0xff]
        %v202 = vld [vmem:[%s166 + $0x58] sm:$0xff]
        %v203 = vld [vmem:[%s166 + $0x60] sm:$0xff]
        %v204 = vld [vmem:[%s166 + $0x68] sm:$0xff]
        %v205 = vld [vmem:[%s166 + $0x70] sm:$0xff]
        %v206 = vld [vmem:[%s166 + $0x78] sm:$0xff]
        %v207 = vld [vmem:[%s166 + $0x80] sm:$0xff]
        %v208 = vld [vmem:[%s166 + $0x88] sm:$0xff]
        %v209 = vld [vmem:[%s166 + $0x90] sm:$0xff]
        %v210 = vld [vmem:[%s166 + $0x98] sm:$0xff]
        %v211 = vld [vmem:[%s166 + $0xa0] sm:$0xff]
        %v212 = vld [vmem:[%s166 + $0xa8] sm:$0xff]
        %v213 = vld [vmem:[%s166 + $0xb0] sm:$0xff]
        %v214 = vld [vmem:[%s166 + $0xb8] sm:$0xff]
        %v215 = vld [vmem:[%s166 + $0xc0] sm:$0xff]
        %v216 = vld [vmem:[%s166 + $0xc8] sm:$0xff]
        %v217 = vld [vmem:[%s166 + $0xd0] sm:$0xff]
        %v218 = vld [vmem:[%s166 + $0xd8] sm:$0xff]
        %v219 = vld [vmem:[%s166 + $0xe0] sm:$0xff]
        %v220 = vld [vmem:[%s166 + $0xe8] sm:$0xff]
        %v221 = vld [vmem:[%s166 + $0xf0] sm:$0xff]
        %v222 = vld [vmem:[%s166 + $0xf8] sm:$0xff]
        %223 = vadd.xlane.f32.xlu0 %v191
        %v224 = vpop.xlane.xlu0 %223
        %225 = vadd.xlane.f32.xlu0 %v192
        %v226 = vpop.xlane.xlu0 %225
        %227 = vadd.xlane.f32.xlu0 %v193
        %v228 = vpop.xlane.xlu0 %227
        %229 = vadd.xlane.f32.xlu0 %v194
        %v230 = vpop.xlane.xlu0 %229
        %231 = vadd.xlane.f32.xlu0 %v195
        %v232 = vpop.xlane.xlu0 %231
        %233 = vadd.xlane.f32.xlu0 %v196
        %v234 = vpop.xlane.xlu0 %233
        %235 = vadd.xlane.f32.xlu0 %v197
        %v236 = vpop.xlane.xlu0 %235
        %237 = vadd.xlane.f32.xlu0 %v198
        %v238 = vpop.xlane.xlu0 %237
        %239 = vadd.xlane.f32.xlu0 %v199
        %v240 = vpop.xlane.xlu0 %239
        %241 = vadd.xlane.f32.xlu0 %v200
        %v242 = vpop.xlane.xlu0 %241
        %243 = vadd.xlane.f32.xlu0 %v201
        %v244 = vpop.xlane.xlu0 %243
        %245 = vadd.xlane.f32.xlu0 %v202
        %v246 = vpop.xlane.xlu0 %245
        %247 = vadd.xlane.f32.xlu0 %v203
        %v248 = vpop.xlane.xlu0 %247
        %249 = vadd.xlane.f32.xlu0 %v204
        %v250 = vpop.xlane.xlu0 %249
        %251 = vadd.xlane.f32.xlu0 %v205
        %v252 = vpop.xlane.xlu0 %251
        %253 = vadd.xlane.f32.xlu0 %v206
        %v254 = vpop.xlane.xlu0 %253
        %255 = vadd.xlane.f32.xlu0 %v207
        %v256 = vpop.xlane.xlu0 %255
        %257 = vadd.xlane.f32.xlu0 %v208
        %v258 = vpop.xlane.xlu0 %257
        %259 = vadd.xlane.f32.xlu0 %v209
        %v260 = vpop.xlane.xlu0 %259
        %261 = vadd.xlane.f32.xlu0 %v210
        %v262 = vpop.xlane.xlu0 %261
        %263 = vadd.xlane.f32.xlu0 %v211
        %v264 = vpop.xlane.xlu0 %263
        %265 = vadd.xlane.f32.xlu0 %v212
        %v266 = vpop.xlane.xlu0 %265
        %267 = vadd.xlane.f32.xlu0 %v213
        %v268 = vpop.xlane.xlu0 %267
        %269 = vadd.xlane.f32.xlu0 %v214
        %v270 = vpop.xlane.xlu0 %269
        %271 = vadd.xlane.f32.xlu0 %v215
        %v272 = vpop.xlane.xlu0 %271
        %273 = vadd.xlane.f32.xlu0 %v216
        %v274 = vpop.xlane.xlu0 %273
        %275 = vadd.xlane.f32.xlu0 %v217
        %v276 = vpop.xlane.xlu0 %275
        %277 = vadd.xlane.f32.xlu0 %v218
        %v278 = vpop.xlane.xlu0 %277
        %279 = vadd.xlane.f32.xlu0 %v219
        %v280 = vpop.xlane.xlu0 %279
        %281 = vadd.xlane.f32.xlu0 %v220
        %v282 = vpop.xlane.xlu0 %281
        %283 = vadd.xlane.f32.xlu0 %v221
        %v284 = vpop.xlane.xlu0 %283
        %285 = vadd.xlane.f32.xlu0 %v222
        %v286 = vpop.xlane.xlu0 %285
        %v287 = vmul.f32 %v224, 0.0078125
        %v288 = vmul.f32 %v226, 0.0078125
        %v289 = vmul.f32 %v228, 0.0078125
        %v290 = vmul.f32 %v230, 0.0078125
        %v291 = vmul.f32 %v232, 0.0078125
        %v292 = vmul.f32 %v234, 0.0078125
        %v293 = vmul.f32 %v236, 0.0078125
        %v294 = vmul.f32 %v238, 0.0078125
        %v295 = vmul.f32 %v240, 0.0078125
        %v296 = vmul.f32 %v242, 0.0078125
        %v297 = vmul.f32 %v244, 0.0078125
        %v298 = vmul.f32 %v246, 0.0078125
        %v299 = vmul.f32 %v248, 0.0078125
        %v300 = vmul.f32 %v250, 0.0078125
        %v301 = vmul.f32 %v252, 0.0078125
        %v302 = vmul.f32 %v254, 0.0078125
        %v303 = vmul.f32 %v256, 0.0078125
        %v304 = vmul.f32 %v258, 0.0078125
        %v305 = vmul.f32 %v260, 0.0078125
        %v306 = vmul.f32 %v262, 0.0078125
        %v307 = vmul.f32 %v264, 0.0078125
        %v308 = vmul.f32 %v266, 0.0078125
        %v309 = vmul.f32 %v268, 0.0078125
        %v310 = vmul.f32 %v270, 0.0078125
        %v311 = vmul.f32 %v272, 0.0078125
        %v312 = vmul.f32 %v274, 0.0078125
        %v313 = vmul.f32 %v276, 0.0078125
        %v314 = vmul.f32 %v278, 0.0078125
        %v315 = vmul.f32 %v280, 0.0078125
        %v316 = vmul.f32 %v282, 0.0078125
        %v317 = vmul.f32 %v284, 0.0078125
        %v318 = vmul.f32 %v286, 0.0078125
        %v319 = vsub.f32 %v191, %v287
        %v320 = vsub.f32 %v192, %v288
        %v321 = vsub.f32 %v193, %v289
        %v322 = vsub.f32 %v194, %v290
        %v323 = vsub.f32 %v195, %v291
        %v324 = vsub.f32 %v196, %v292
        %v325 = vsub.f32 %v197, %v293
        %v326 = vsub.f32 %v198, %v294
        %v327 = vsub.f32 %v199, %v295
        %v328 = vsub.f32 %v200, %v296
        %v329 = vsub.f32 %v201, %v297
        %v330 = vsub.f32 %v202, %v298
        %v331 = vsub.f32 %v203, %v299
        %v332 = vsub.f32 %v204, %v300
        %v333 = vsub.f32 %v205, %v301
        %v334 = vsub.f32 %v206, %v302
        %v335 = vsub.f32 %v207, %v303
        %v336 = vsub.f32 %v208, %v304
        %v337 = vsub.f32 %v209, %v305
        %v338 = vsub.f32 %v210, %v306
        %v339 = vsub.f32 %v211, %v307
        %v340 = vsub.f32 %v212, %v308
        %v341 = vsub.f32 %v213, %v309
        %v342 = vsub.f32 %v214, %v310
        %v343 = vsub.f32 %v215, %v311
        %v344 = vsub.f32 %v216, %v312
        %v345 = vsub.f32 %v217, %v313
        %v346 = vsub.f32 %v218, %v314
        %v347 = vsub.f32 %v219, %v315
        %v348 = vsub.f32 %v220, %v316
        %v349 = vsub.f32 %v221, %v317
        %v350 = vsub.f32 %v222, %v318
        %v351 = vmul.f32 %v319, %v319
        %v352 = vmul.f32 %v320, %v320
        %v353 = vmul.f32 %v321, %v321
        %v354 = vmul.f32 %v322, %v322
        %v355 = vmul.f32 %v323, %v323
        %v356 = vmul.f32 %v324, %v324
        %v357 = vmul.f32 %v325, %v325
        %v358 = vmul.f32 %v326, %v326
        %v359 = vmul.f32 %v327, %v327
        %v360 = vmul.f32 %v328, %v328
        %v361 = vmul.f32 %v329, %v329
        %v362 = vmul.f32 %v330, %v330
        %v363 = vmul.f32 %v331, %v331
        %v364 = vmul.f32 %v332, %v332
        %v365 = vmul.f32 %v333, %v333
        %v366 = vmul.f32 %v334, %v334
        %v367 = vmul.f32 %v335, %v335
        %v368 = vmul.f32 %v336, %v336
        %v369 = vmul.f32 %v337, %v337
        %v370 = vmul.f32 %v338, %v338
        %v371 = vmul.f32 %v339, %v339
        %v372 = vmul.f32 %v340, %v340
        %v373 = vmul.f32 %v341, %v341
        %v374 = vmul.f32 %v342, %v342
        %v375 = vmul.f32 %v343, %v343
        %v376 = vmul.f32 %v344, %v344
        %v377 = vmul.f32 %v345, %v345
        %v378 = vmul.f32 %v346, %v346
        %v379 = vmul.f32 %v347, %v347
        %v380 = vmul.f32 %v348, %v348
        %v381 = vmul.f32 %v349, %v349
        %v382 = vmul.f32 %v350, %v350
        %383 = vadd.xlane.f32.xlu0 %v351
        %v384 = vpop.xlane.xlu0 %383
        %385 = vadd.xlane.f32.xlu0 %v352
        %v386 = vpop.xlane.xlu0 %385
        %387 = vadd.xlane.f32.xlu0 %v353
        %v388 = vpop.xlane.xlu0 %387
        %389 = vadd.xlane.f32.xlu0 %v354
        %v390 = vpop.xlane.xlu0 %389
        %391 = vadd.xlane.f32.xlu0 %v355
        %v392 = vpop.xlane.xlu0 %391
        %393 = vadd.xlane.f32.xlu0 %v356
        %v394 = vpop.xlane.xlu0 %393
        %395 = vadd.xlane.f32.xlu0 %v357
        %v396 = vpop.xlane.xlu0 %395
        %397 = vadd.xlane.f32.xlu0 %v358
        %v398 = vpop.xlane.xlu0 %397
        %399 = vadd.xlane.f32.xlu0 %v359
        %v400 = vpop.xlane.xlu0 %399
        %401 = vadd.xlane.f32.xlu0 %v360
        %v402 = vpop.xlane.xlu0 %401
        %403 = vadd.xlane.f32.xlu0 %v361
        %v404 = vpop.xlane.xlu0 %403
        %405 = vadd.xlane.f32.xlu0 %v362
        %v406 = vpop.xlane.xlu0 %405
        %407 = vadd.xlane.f32.xlu0 %v363
        %v408 = vpop.xlane.xlu0 %407
        %409 = vadd.xlane.f32.xlu0 %v364
        %v410 = vpop.xlane.xlu0 %409
        %411 = vadd.xlane.f32.xlu0 %v365
        %v412 = vpop.xlane.xlu0 %411
        %413 = vadd.xlane.f32.xlu0 %v366
        %v414 = vpop.xlane.xlu0 %413
        %415 = vadd.xlane.f32.xlu0 %v367
        %v416 = vpop.xlane.xlu0 %415
        %417 = vadd.xlane.f32.xlu0 %v368
        %v418 = vpop.xlane.xlu0 %417
        %419 = vadd.xlane.f32.xlu0 %v369
        %v420 = vpop.xlane.xlu0 %419
        %421 = vadd.xlane.f32.xlu0 %v370
        %v422 = vpop.xlane.xlu0 %421
        %423 = vadd.xlane.f32.xlu0 %v371
        %v424 = vpop.xlane.xlu0 %423
        %425 = vadd.xlane.f32.xlu0 %v372
        %v426 = vpop.xlane.xlu0 %425
        %427 = vadd.xlane.f32.xlu0 %v373
        %v428 = vpop.xlane.xlu0 %427
        %429 = vadd.xlane.f32.xlu0 %v374
        %v430 = vpop.xlane.xlu0 %429
        %431 = vadd.xlane.f32.xlu0 %v375
        %v432 = vpop.xlane.xlu0 %431
        %433 = vadd.xlane.f32.xlu0 %v376
        %v434 = vpop.xlane.xlu0 %433
        %435 = vadd.xlane.f32.xlu0 %v377
        %v436 = vpop.xlane.xlu0 %435
        %437 = vadd.xlane.f32.xlu0 %v378
        %v438 = vpop.xlane.xlu0 %437
        %439 = vadd.xlane.f32.xlu0 %v379
        %v440 = vpop.xlane.xlu0 %439
        %441 = vadd.xlane.f32.xlu0 %v380
        %v442 = vpop.xlane.xlu0 %441
        %443 = vadd.xlane.f32.xlu0 %v381
        %v444 = vpop.xlane.xlu0 %443
        %445 = vadd.xlane.f32.xlu0 %v382
        %v446 = vpop.xlane.xlu0 %445
        %v447 = vmul.f32 %v384, 0.0078125
        %v448 = vmul.f32 %v386, 0.0078125
        %v449 = vmul.f32 %v388, 0.0078125
        %v450 = vmul.f32 %v390, 0.0078125
        %v451 = vmul.f32 %v392, 0.0078125
        %v452 = vmul.f32 %v394, 0.0078125
        %v453 = vmul.f32 %v396, 0.0078125
        %v454 = vmul.f32 %v398, 0.0078125
        %v455 = vmul.f32 %v400, 0.0078125
        %v456 = vmul.f32 %v402, 0.0078125
        %v457 = vmul.f32 %v404, 0.0078125
        %v458 = vmul.f32 %v406, 0.0078125
        %v459 = vmul.f32 %v408, 0.0078125
        %v460 = vmul.f32 %v410, 0.0078125
        %v461 = vmul.f32 %v412, 0.0078125
        %v462 = vmul.f32 %v414, 0.0078125
        %v463 = vmul.f32 %v416, 0.0078125
        %v464 = vmul.f32 %v418, 0.0078125
        %v465 = vmul.f32 %v420, 0.0078125
        %v466 = vmul.f32 %v422, 0.0078125
        %v467 = vmul.f32 %v424, 0.0078125
        %v468 = vmul.f32 %v426, 0.0078125
        %v469 = vmul.f32 %v428, 0.0078125
        %v470 = vmul.f32 %v430, 0.0078125
        %v471 = vmul.f32 %v432, 0.0078125
        %v472 = vmul.f32 %v434, 0.0078125
        %v473 = vmul.f32 %v436, 0.0078125
        %v474 = vmul.f32 %v438, 0.0078125
        %v475 = vmul.f32 %v440, 0.0078125
        %v476 = vmul.f32 %v442, 0.0078125
        %v477 = vmul.f32 %v444, 0.0078125
        %v478 = vmul.f32 %v446, 0.0078125
        %v479 = vadd.f32 %v447, 1e-05
        %v480 = vadd.f32 %v448, 1e-05
        %v481 = vadd.f32 %v449, 1e-05
        %v482 = vadd.f32 %v450, 1e-05
        %v483 = vadd.f32 %v451, 1e-05
        %v484 = vadd.f32 %v452, 1e-05
        %v485 = vadd.f32 %v453, 1e-05
        %v486 = vadd.f32 %v454, 1e-05
        %v487 = vadd.f32 %v455, 1e-05
        %v488 = vadd.f32 %v456, 1e-05
        %v489 = vadd.f32 %v457, 1e-05
        %v490 = vadd.f32 %v458, 1e-05
        %v491 = vadd.f32 %v459, 1e-05
        %v492 = vadd.f32 %v460, 1e-05
        %v493 = vadd.f32 %v461, 1e-05
        %v494 = vadd.f32 %v462, 1e-05
        %v495 = vadd.f32 %v463, 1e-05
        %v496 = vadd.f32 %v464, 1e-05
        %v497 = vadd.f32 %v465, 1e-05
        %v498 = vadd.f32 %v466, 1e-05
        %v499 = vadd.f32 %v467, 1e-05
        %v500 = vadd.f32 %v468, 1e-05
        %v501 = vadd.f32 %v469, 1e-05
        %v502 = vadd.f32 %v470, 1e-05
        %v503 = vadd.f32 %v471, 1e-05
        %v504 = vadd.f32 %v472, 1e-05
        %v505 = vadd.f32 %v473, 1e-05
        %v506 = vadd.f32 %v474, 1e-05
        %v507 = vadd.f32 %v475, 1e-05
        %v508 = vadd.f32 %v476, 1e-05
        %v509 = vadd.f32 %v477, 1e-05
        %v510 = vadd.f32 %v478, 1e-05
        %v511 = vrsqrt.pop %v479
        %v512 = vrsqrt.pop %v480
        %v513 = vrsqrt.pop %v481
        %v514 = vrsqrt.pop %v482
        %v515 = vrsqrt.pop %v483
        %v516 = vrsqrt.pop %v484
        %v517 = vrsqrt.pop %v485
        %v518 = vrsqrt.pop %v486
        %v519 = vrsqrt.pop %v487
        %v520 = vrsqrt.pop %v488
        %v521 = vrsqrt.pop %v489
        %v522 = vrsqrt.pop %v490
        %v523 = vrsqrt.pop %v491
        %v524 = vrsqrt.pop %v492
        %v525 = vrsqrt.pop %v493
        %v526 = vrsqrt.pop %v494
        %v527 = vrsqrt.pop %v495
        %v528 = vrsqrt.pop %v496
        %v529 = vrsqrt.pop %v497
        %v530 = vrsqrt.pop %v498
        %v531 = vrsqrt.pop %v499
        %v532 = vrsqrt.pop %v500
        %v533 = vrsqrt.pop %v501
        %v534 = vrsqrt.pop %v502
        %v535 = vrsqrt.pop %v503
        %v536 = vrsqrt.pop %v504
        %v537 = vrsqrt.pop %v505
        %v538 = vrsqrt.pop %v506
        %v539 = vrsqrt.pop %v507
        %v540 = vrsqrt.pop %v508
        %v541 = vrsqrt.pop %v509
        %v542 = vrsqrt.pop %v510
        %v543 = vld [vmem:[%s1] sm:$0x1]
        %v544 = vld [vmem:[%s2] sm:$0x1]
        %v545 = vmul.f32 %v319, %v511
        %v546 = vmul.f32 %v320, %v512
        %v547 = vmul.f32 %v321, %v513
        %v548 = vmul.f32 %v322, %v514
        %v549 = vmul.f32 %v323, %v515
        %v550 = vmul.f32 %v324, %v516
        %v551 = vmul.f32 %v325, %v517
        %v552 = vmul.f32 %v326, %v518
        %v553 = vmul.f32 %v327, %v519
        %v554 = vmul.f32 %v328, %v520
        %v555 = vmul.f32 %v329, %v521
        %v556 = vmul.f32 %v330, %v522
        %v557 = vmul.f32 %v331, %v523
        %v558 = vmul.f32 %v332, %v524
        %v559 = vmul.f32 %v333, %v525
        %v560 = vmul.f32 %v334, %v526
        %v561 = vmul.f32 %v335, %v527
        %v562 = vmul.f32 %v336, %v528
        %v563 = vmul.f32 %v337, %v529
        %v564 = vmul.f32 %v338, %v530
        %v565 = vmul.f32 %v339, %v531
        %v566 = vmul.f32 %v340, %v532
        %v567 = vmul.f32 %v341, %v533
        %v568 = vmul.f32 %v342, %v534
        %v569 = vmul.f32 %v343, %v535
        %v570 = vmul.f32 %v344, %v536
        %v571 = vmul.f32 %v345, %v537
        %v572 = vmul.f32 %v346, %v538
        %v573 = vmul.f32 %v347, %v539
        %v574 = vmul.f32 %v348, %v540
        %v575 = vmul.f32 %v349, %v541
        %v576 = vmul.f32 %v350, %v542
        %v578 = vlaneseq
        %v579 = vshrl.u32 %v578, 7
        %v580 = vsub.s32 0, %v579
        %v581 = vrot.slane %v543, %v580
        %v583 = vmul.f32 %v545, %v581
        %v584 = vmul.f32 %v546, %v581
        %v585 = vmul.f32 %v547, %v581
        %v586 = vmul.f32 %v548, %v581
        %v587 = vmul.f32 %v549, %v581
        %v588 = vmul.f32 %v550, %v581
        %v589 = vmul.f32 %v551, %v581
        %v590 = vmul.f32 %v552, %v581
        %v591 = vmul.f32 %v553, %v581
        %v592 = vmul.f32 %v554, %v581
        %v593 = vmul.f32 %v555, %v581
        %v594 = vmul.f32 %v556, %v581
        %v595 = vmul.f32 %v557, %v581
        %v596 = vmul.f32 %v558, %v581
        %v597 = vmul.f32 %v559, %v581
        %v598 = vmul.f32 %v560, %v581
        %v599 = vmul.f32 %v561, %v581
        %v600 = vmul.f32 %v562, %v581
        %v601 = vmul.f32 %v563, %v581
        %v602 = vmul.f32 %v564, %v581
        %v603 = vmul.f32 %v565, %v581
        %v604 = vmul.f32 %v566, %v581
        %v605 = vmul.f32 %v567, %v581
        %v606 = vmul.f32 %v568, %v581
        %v607 = vmul.f32 %v569, %v581
        %v608 = vmul.f32 %v570, %v581
        %v609 = vmul.f32 %v571, %v581
        %v610 = vmul.f32 %v572, %v581
        %v611 = vmul.f32 %v573, %v581
        %v612 = vmul.f32 %v574, %v581
        %v613 = vmul.f32 %v575, %v581
        %v614 = vmul.f32 %v576, %v581
        %v616 = vlaneseq
        %v617 = vshrl.u32 %v616, 7
        %v618 = vsub.s32 0, %v617
        %v619 = vrot.slane %v544, %v618
        %v621 = vadd.f32 %v583, %v619
        %v622 = vadd.f32 %v584, %v619
        %v623 = vadd.f32 %v585, %v619
        %v624 = vadd.f32 %v586, %v619
        %v625 = vadd.f32 %v587, %v619
        %v626 = vadd.f32 %v588, %v619
        %v627 = vadd.f32 %v589, %v619
        %v628 = vadd.f32 %v590, %v619
        %v629 = vadd.f32 %v591, %v619
        %v630 = vadd.f32 %v592, %v619
        %v631 = vadd.f32 %v593, %v619
        %v632 = vadd.f32 %v594, %v619
        %v633 = vadd.f32 %v595, %v619
        %v634 = vadd.f32 %v596, %v619
        %v635 = vadd.f32 %v597, %v619
        %v636 = vadd.f32 %v598, %v619
        %v637 = vadd.f32 %v599, %v619
        %v638 = vadd.f32 %v600, %v619
        %v639 = vadd.f32 %v601, %v619
        %v640 = vadd.f32 %v602, %v619
        %v641 = vadd.f32 %v603, %v619
        %v642 = vadd.f32 %v604, %v619
        %v643 = vadd.f32 %v605, %v619
        %v644 = vadd.f32 %v606, %v619
        %v645 = vadd.f32 %v607, %v619
        %v646 = vadd.f32 %v608, %v619
        %v647 = vadd.f32 %v609, %v619
        %v648 = vadd.f32 %v610, %v619
        %v649 = vadd.f32 %v611, %v619
        %v650 = vadd.f32 %v612, %v619
        %v651 = vadd.f32 %v613, %v619
        %v652 = vadd.f32 %v614, %v619
        %653 = vst [vmem:[%s188] sm:$0xff] %v621
        %654 = vst [vmem:[%s188 + $0x8] sm:$0xff] %v622
        %655 = vst [vmem:[%s188 + $0x10] sm:$0xff] %v623
        %656 = vst [vmem:[%s188 + $0x18] sm:$0xff] %v624
        %657 = vst [vmem:[%s188 + $0x20] sm:$0xff] %v625
        %658 = vst [vmem:[%s188 + $0x28] sm:$0xff] %v626
        %659 = vst [vmem:[%s188 + $0x30] sm:$0xff] %v627
        %660 = vst [vmem:[%s188 + $0x38] sm:$0xff] %v628
        %661 = vst [vmem:[%s188 + $0x40] sm:$0xff] %v629
        %662 = vst [vmem:[%s188 + $0x48] sm:$0xff] %v630
        %663 = vst [vmem:[%s188 + $0x50] sm:$0xff] %v631
        %664 = vst [vmem:[%s188 + $0x58] sm:$0xff] %v632
        %665 = vst [vmem:[%s188 + $0x60] sm:$0xff] %v633
        %666 = vst [vmem:[%s188 + $0x68] sm:$0xff] %v634
        %667 = vst [vmem:[%s188 + $0x70] sm:$0xff] %v635
        %668 = vst [vmem:[%s188 + $0x78] sm:$0xff] %v636
        %669 = vst [vmem:[%s188 + $0x80] sm:$0xff] %v637
        %670 = vst [vmem:[%s188 + $0x88] sm:$0xff] %v638
        %671 = vst [vmem:[%s188 + $0x90] sm:$0xff] %v639
        %672 = vst [vmem:[%s188 + $0x98] sm:$0xff] %v640
        %673 = vst [vmem:[%s188 + $0xa0] sm:$0xff] %v641
        %674 = vst [vmem:[%s188 + $0xa8] sm:$0xff] %v642
        %675 = vst [vmem:[%s188 + $0xb0] sm:$0xff] %v643
        %676 = vst [vmem:[%s188 + $0xb8] sm:$0xff] %v644
        %677 = vst [vmem:[%s188 + $0xc0] sm:$0xff] %v645
        %678 = vst [vmem:[%s188 + $0xc8] sm:$0xff] %v646
        %679 = vst [vmem:[%s188 + $0xd0] sm:$0xff] %v647
        %680 = vst [vmem:[%s188 + $0xd8] sm:$0xff] %v648
        %681 = vst [vmem:[%s188 + $0xe0] sm:$0xff] %v649
        %682 = vst [vmem:[%s188 + $0xe8] sm:$0xff] %v650
        %683 = vst [vmem:[%s188 + $0xf0] sm:$0xff] %v651
        %684 = vst [vmem:[%s188 + $0xf8] sm:$0xff] %v652
        %s685 = sand.u32 %s96, 1
        %s686 = scalar_lea.sflag [#allocation4], %s685
        %s687 = sand.u32 %s96, 1
        %s688 = smul.addr %s687, 256
        %s689 = scalar_lea.vmem [#allocation5], %s688
        // Predicated region
        $region37: #{withbias_layernorm.1} parent=31 // pred_check
          %p690 = pneg %p106
        $region38: #{withbias_layernorm.1} parent=31 // pred_check_branch
          %692 = sbr.rel (%p690) target = $region40
        $region39: #{withbias_layernorm.1} parent=31 // pred_region
          %s693 = smul.u32 32, %s20
          %s695 = ssub.s32 4096, 4096
          %696 = vsyncadd %s686, %s695
          %s697 = smul.addr %s693, 128
          %s698 = scalar_lea.hbm %s3, %s697
          %s699 = sshll.u32 %s689, 4
          %s700 = int_to_ptr.vmem [resolvable:$true] %s699
          %705 = dma.vmem_to_hbm [thread:$0]  %s700, 4096, %s698, %s686, 128, 128, 8
        $region40: #{withbias_layernorm.1} parent=31 // pred_fallthru
          _
      $region32: #{withbias_layernorm.1} parent=5 // pred_fallthru
        _
      %p706 = scmp.le.s32.totalorder 2, %s15
      // Predicated region
      $region41: #{withbias_layernorm.1} parent=5 // pred_check
        %p707 = pneg %p706
      $region42: #{withbias_layernorm.1} parent=5 // pred_check_branch
        %709 = sbr.rel (%p707) target = $region44
      $region43: #{withbias_layernorm.1} parent=5 // pred_region
        %s710 = ssub.s32 %s15, 2
        // Predicated region
        $region45: #{withbias_layernorm.1} parent=43 // pred_check
          %p711 = pneg %p112
        $region46: #{withbias_layernorm.1} parent=43 // pred_check_branch
          %713 = sbr.rel (%p711) target = $region48
        $region47: #{withbias_layernorm.1} parent=43 // pred_region
          %s714 = sand.u32 %s97, 1
          %s715 = scalar_lea.sflag [#allocation4], %s714
          %s716 = sand.u32 %s97, 1
          %s717 = smul.addr %s716, 256
          %s718 = scalar_lea.vmem [#allocation5], %s717
          %719 = dma.done %s715, 4096
        $region48: #{withbias_layernorm.1} parent=43 // pred_fallthru
          _
      $region44: #{withbias_layernorm.1} parent=5 // pred_fallthru
        _
    $region6: #{withbias_layernorm.1} parent=1 // loop_footer
      %s19 = sadd.s32 1, %s15
    $region7: #{withbias_layernorm.1} parent=1 // loop_footer_branch
      %14 = sbr.rel target = $region3
    $region8: #{withbias_layernorm.1} parent=1 // loop_exit
      _
    %720 = vsyncpa [#allocation3], 1
    %s721 = scalar_lea.sflag [#allocation3], 1
    %722 = vsyncpa %s721, 1
    %723 = vsyncpa [#allocation4], 1
    %s724 = scalar_lea.sflag [#allocation4], 1
    %725 = vsyncpa %s724, 1

</llo_original>
